<compile_context>
chip_gen: v5e
topology: v5e:2x2
jax: 0.10.0
libtpu: 0.0.40
codegen_flags: <defaults>
</compile_context>

<pallas_src>
import math
from functools import partial

import jax
import jax.numpy as jnp
from jax import lax
from jax.experimental import pallas as pl
from jax.experimental.pallas import tpu as pltpu


# ---------------------------------------------------------------------------
# Pallas flash-attention kernel (one (batch, head_group, q_tile, k_tile) step)
# ---------------------------------------------------------------------------
def _flash_attn_kernel(q_ref, k_ref, v_ref, mask_ref, o_ref,
                       m_sc, l_sc, acc_sc, *,
                       tq: int, tk: int, heads_per_blk: int, head_dim: int):
    """
    q_ref    : [1, hp, TQ, d] bf16 (1/sqrt(d) already folded into Q weights)
    k_ref    : [1, hp, TK, d] bf16
    v_ref    : [1, hp, TK, d] bf16
    mask_ref : [1, 1, 1, TK]  f32   additive key mask
    o_ref    : [1, TQ, hp*d]        head-contiguous output slab
    m/l/acc  : online-softmax state, resident across the k_tile axis
    """
    qt = pl.program_id(2)
    kt = pl.program_id(3)

    @pl.when(kt == 0)
    def _init():
        m_sc[...] = jnp.full_like(m_sc, -jnp.inf)
        l_sc[...] = jnp.zeros_like(l_sc)
        acc_sc[...] = jnp.zeros_like(acc_sc)

    # Causal tile skipping: a key tile contributes only if its first key
    # position is <= the last query position of this q tile.
    @pl.when(kt * tk < (qt + 1) * tq)
    def _compute():
        q = q_ref[0]                                  # [hp, TQ, d]
        k = k_ref[0]                                  # [hp, TK, d]
        v = v_ref[0]                                  # [hp, TK, d]

        # Q @ K^T without materializing K^T; f32 accumulation on the MXU.
        s = jnp.einsum("hqd,hkd->hqk", q, k,
                       preferred_element_type=jnp.float32)          # [hp,TQ,TK]

        # Causal + additive key mask folded into one select.  The causal
        # compare broadcasts a (TQ,1) row iota against a (1,TK) col iota.
        row = qt * tq + lax.broadcasted_iota(jnp.int32, (tq, 1), 0)
        col = kt * tk + lax.broadcasted_iota(jnp.int32, (1, tk), 1)
        add_mask = mask_ref[0, 0]                                    # [1, TK]
        s = jnp.where(col <= row, s + add_mask, jnp.float32(-1e9))

        # Online (flash) softmax update in f32.
        m_prev = m_sc[...]
        m_new = jnp.maximum(m_prev, s.max(-1, keepdims=True))
        alpha = jnp.exp(m_prev - m_new)
        p = jnp.exp(s - m_new)
        l_sc[...] = alpha * l_sc[...] + p.sum(-1, keepdims=True)
        acc_sc[...] = alpha * acc_sc[...] + jnp.einsum(
            "hqk,hkd->hqd", p.astype(v.dtype), v,
            preferred_element_type=jnp.float32)
        m_sc[...] = m_new

    @pl.when(kt == pl.num_programs(3) - 1)
    def _finalize():
        # TODO(synk): attention-prob dropout is a no-op here (eval mode / p=0).
        o = acc_sc[...] * pl.reciprocal(l_sc[...], approx=True)     # [hp,TQ,d]
        # h q d -> q (h d): heads become contiguous in the lane dim, so the
        # head merge is a free reshape and no wrapper transpose is needed.
        o_ref[0] = o.transpose(1, 0, 2).reshape(
            tq, heads_per_blk * head_dim).astype(o_ref.dtype)


# ---------------------------------------------------------------------------
# Parameter prep (run once, not per call)
# ---------------------------------------------------------------------------
def prepare_qkv_params(params, num_heads: int):
    """Fuse Q/K/V projection params once. Weights are x @ W ([H_in, H_out])."""
    H = params["wq"].shape[0]
    assert H % num_heads == 0
    d = H // num_heads
    scale = 1.0 / math.sqrt(d)
    wqkv = jnp.concatenate(
        [params["wq"] * scale, params["wk"], params["wv"]],
        axis=1).astype(jnp.bfloat16)                                  # [H, 3H]
    bqkv = jnp.concatenate(
        [params["bq"] * scale, params["bk"], params["bv"]]
    ).astype(jnp.float32)                                             # [3H]
    return {"wqkv": wqkv, "bqkv": bqkv, "num_heads": num_heads}


def _pick_seq_tile(T: int, pref: int = 256) -> int:
    if T % pref == 0:
        return pref
    if T % 128 == 0:
        return 128
    # TODO(synk): pad odd sequence lengths to a multiple of 128 instead of
    # falling back to a full-T block.
    return T


def _pick_head_group(num_heads: int, d: int) -> int:
    # Smallest divisor of num_heads whose grouped lane width is a multiple of
    # 128; otherwise all heads (grouped width then equals the full hidden dim).
    for hp in range(1, num_heads + 1):
        if num_heads % hp == 0 and (hp * d) % 128 == 0:
            return hp
    return num_heads


# ---------------------------------------------------------------------------
# Forward wrapper
# ---------------------------------------------------------------------------
def causal_self_attention(hidden_states, attention_mask, prepared):
    """hidden_states: [B, T, H], attention_mask: [B, 1, 1, T] -> [B, T, H]."""
    wqkv, bqkv = prepared["wqkv"], prepared["bqkv"]
    num_heads = prepared["num_heads"]
    B, T, H = hidden_states.shape
    assert H % num_heads == 0
    d = H // num_heads

    # ---- Stage 1: monolithic QKV projection (hoisted out of the grid). ----
    x2 = hidden_states.reshape(B * T, H).astype(jnp.bfloat16)
    qkv = jnp.dot(x2, wqkv, preferred_element_type=jnp.float32) + bqkv   # [B*T,3H]
    qkv = qkv.reshape(B, T, 3, num_heads, d).astype(jnp.bfloat16)
    qkv = qkv.transpose(2, 0, 3, 1, 4)                # [3, B, nh, T, d]
    q, k, v = qkv[0], qkv[1], qkv[2]

    mask_f32 = attention_mask.astype(jnp.float32)

    # ---- Stage 2: flash-style causal attention kernel. ----
    tq = _pick_seq_tile(T)
    tk = _pick_seq_tile(T)
    hp = _pick_head_group(num_heads, d)
    n_hg = num_heads // hp
    n_qt = T // tq
    n_kt = T // tk

    kernel = partial(_flash_attn_kernel, tq=tq, tk=tk,
                     heads_per_blk=hp, head_dim=d)

    out_dtype = hidden_states.dtype
    elt = jnp.dtype(out_dtype).itemsize
    # Explicit scoped-VMEM budget: double-buffered q/k/v/mask/out tiles +
    # accumulators + score/prob temporaries, with headroom, clamped for v7x.
    est = (2 * (hp * tq * d * 2 + 2 * hp * tk * d * 2 + tk * 4 + tq * hp * d * elt)
           + (2 * hp * tq + hp * tq * d) * 4
           + 3 * hp * tq * tk * 4)
    vmem_limit = int(min(max(2 * est, 16 * 1024 * 1024), 64 * 1024 * 1024))

    out = pl.pallas_call(
        kernel,
        out_shape=jax.ShapeDtypeStruct((B, T, H), out_dtype),
        grid_spec=pltpu.PrefetchScalarGridSpec(
            num_scalar_prefetch=0,
            grid=(B, n_hg, n_qt, n_kt),
            in_specs=[
                pl.BlockSpec((1, hp, tq, d), lambda b, g, i, j: (b, g, i, 0)),  # q (resident over k tiles)
                pl.BlockSpec((1, hp, tk, d), lambda b, g, i, j: (b, g, j, 0)),  # k
                pl.BlockSpec((1, hp, tk, d), lambda b, g, i, j: (b, g, j, 0)),  # v
                pl.BlockSpec((1, 1, 1, tk), lambda b, g, i, j: (b, 0, 0, j)),   # additive mask
            ],
            out_specs=pl.BlockSpec((1, tq, hp * d), lambda b, g, i, j: (b, i, g)),
            scratch_shapes=[
                pltpu.VMEM((hp, tq, 1), jnp.float32),   # running max
                pltpu.VMEM((hp, tq, 1), jnp.float32),   # running denom
                pltpu.VMEM((hp, tq, d), jnp.float32),   # output accumulator
            ],
        ),
        compiler_params=pltpu.CompilerParams(
            dimension_semantics=("parallel", "parallel", "parallel", "arbitrary"),
            vmem_limit_bytes=vmem_limit,
        ),
    )(q, k, v, mask_f32)

    # Output is already (B, T, H) with heads contiguous: no transpose needed.
    return out


# ---------------------------------------------------------------------------
# Plain-JAX f32 reference for validation
# ---------------------------------------------------------------------------
def _reference(hidden_states, attention_mask, params, num_heads):
    B, T, H = hidden_states.shape
    d = H // num_heads

    def proj(w, b):
        y = jnp.einsum("bth,hk->btk", hidden_states, w) + b
        return y.reshape(B, T, num_heads, d).transpose(0, 2, 1, 3)  # b h t d

    q = proj(params["wq"], params["bq"])
    k = proj(params["wk"], params["bk"])
    v = proj(params["wv"], params["bv"])

    s = jnp.einsum("bhqd,bhkd->bhqk", q, k) / math.sqrt(d)
    causal = jnp.where(jnp.tril(jnp.ones((T, T), bool)), 0.0, -1e9)
    s = s + attention_mask + causal[None, None]
    p = jax.nn.softmax(s, axis=-1)
    o = jnp.einsum("bhqk,bhkd->bhqd", p, v)
    return o.transpose(0, 2, 1, 3).reshape(B, T, H)


if __name__ == "__main__":
    B, T, H, NH = 2, 8, 32, 4  # batch, seq, hidden, heads (head_dim = 8)

    key = jax.random.PRNGKey(0)
    k_x, k_q, k_k, k_v, k_bq, k_bk, k_bv = jax.random.split(key, 7)

    x = jax.random.normal(k_x, (B, T, H), dtype=jnp.float32)

    # Additive attention mask: last two key positions of batch 1 masked out.
    mask = jnp.zeros((B, 1, 1, T), dtype=jnp.float32)
    mask = mask.at[1, 0, 0, -2:].set(-1e9)

    init_scale = 1.0 / math.sqrt(H)
    params = {
        "wq": jax.random.uniform(k_q, (H, H), jnp.float32, -init_scale, init_scale),
        "wk": jax.random.uniform(k_k, (H, H), jnp.float32, -init_scale, init_scale),
        "wv": jax.random.uniform(k_v, (H, H), jnp.float32, -init_scale, init_scale),
        "bq": jax.random.uniform(k_bq, (H,), jnp.float32, -init_scale, init_scale),
        "bk": jax.random.uniform(k_bk, (H,), jnp.float32, -init_scale, init_scale),
        "bv": jax.random.uniform(k_bv, (H,), jnp.float32, -init_scale, init_scale),
    }

    prepared = prepare_qkv_params(params, num_heads=NH)  # fused once, reused per call

    out = causal_self_attention(x, mask, prepared)
    out = jax.block_until_ready(out)

    ref = _reference(x, mask, params, NH)
    assert out.shape == (B, T, H)
    # Tolerance accounts for bf16 MXU inputs (f32 accumulation / f32 softmax).
    assert jnp.allclose(out, ref, atol=5e-2, rtol=5e-2), "mismatch vs reference"

    print("KERNEL_OK")
</pallas_src>

<mosaic_0001>
module attributes {stable_mosaic.version = 11 : i64} {
  func.func @_flash_attn_kernel(%arg0: i32, %arg1: i32, %arg2: i32, %arg3: i32, %arg4: memref<1x4x8x8xbf16, #tpu.memory_space<vmem>>, %arg5: memref<1x4x8x8xbf16, #tpu.memory_space<vmem>>, %arg6: memref<1x4x8x8xbf16, #tpu.memory_space<vmem>>, %arg7: memref<1x1x1x8xf32, #tpu.memory_space<vmem>>, %arg8: memref<1x8x32xf32, #tpu.memory_space<vmem>>, %arg9: memref<4x8x1xf32, #tpu.memory_space<vmem>>, %arg10: memref<4x8x1xf32, #tpu.memory_space<vmem>>, %arg11: memref<4x8x8xf32, #tpu.memory_space<vmem>>) attributes {dimension_semantics = [#tpu.dimension_semantics<parallel>, #tpu.dimension_semantics<parallel>, #tpu.dimension_semantics<parallel>, #tpu.dimension_semantics<arbitrary>], iteration_bounds = array<i64: 2, 1, 1, 1>, scalar_prefetch = 0 : i64, scratch_operands = 3 : i64, tpu.core_type = #tpu.core_type<tc>, window_params = [{transform_indices = @transform_0, window_bounds = array<i64: 1, 4, 8, 8>}, {transform_indices = @transform_1, window_bounds = array<i64: 1, 4, 8, 8>}, {transform_indices = @transform_2, window_bounds = array<i64: 1, 4, 8, 8>}, {transform_indices = @transform_3, window_bounds = array<i64: 1, 1, 1, 8>}, {transform_indices = @transform_4, window_bounds = array<i64: 1, 8, 32>}]} {
    %c0_i32 = arith.constant 0 : i32
    %0 = arith.cmpi eq, %arg3, %c0_i32 : i32
    %1 = arith.extui %0 : i1 to i32
    %c0_i32_0 = arith.constant 0 : i32
    %2 = arith.cmpi ne, %1, %c0_i32_0 : i32
    scf.if %2 {
      %cst = arith.constant 0xFF800000 : f32
      %12 = vector.broadcast %cst : f32 to vector<4x8x1xf32>
      %c0 = arith.constant 0 : index
      %c0_5 = arith.constant 0 : index
      %c0_6 = arith.constant 0 : index
      %13 = vector.load %arg9[%c0, %c0_5, %c0_6] : memref<4x8x1xf32, #tpu.memory_space<vmem>>, vector<4x8x1xf32>
      tpu.vector_store %arg9[%c0, %c0_5, %c0_6], %12 {strides = array<i32>} : memref<4x8x1xf32, #tpu.memory_space<vmem>>, vector<4x8x1xf32>,
      %cst_7 = arith.constant 0.000000e+00 : f32
      %14 = vector.broadcast %cst_7 : f32 to vector<4x8x1xf32>
      %c0_8 = arith.constant 0 : index
      %c0_9 = arith.constant 0 : index
      %c0_10 = arith.constant 0 : index
      %15 = vector.load %arg10[%c0_8, %c0_9, %c0_10] : memref<4x8x1xf32, #tpu.memory_space<vmem>>, vector<4x8x1xf32>
      tpu.vector_store %arg10[%c0_8, %c0_9, %c0_10], %14 {strides = array<i32>} : memref<4x8x1xf32, #tpu.memory_space<vmem>>, vector<4x8x1xf32>,
      %cst_11 = arith.constant 0.000000e+00 : f32
      %16 = vector.broadcast %cst_11 : f32 to vector<4x8x8xf32>
      %c0_12 = arith.constant 0 : index
      %c0_13 = arith.constant 0 : index
      %c0_14 = arith.constant 0 : index
      %17 = vector.load %arg11[%c0_12, %c0_13, %c0_14] : memref<4x8x8xf32, #tpu.memory_space<vmem>>, vector<4x8x8xf32>
      tpu.vector_store %arg11[%c0_12, %c0_13, %c0_14], %16 {strides = array<i32>} : memref<4x8x8xf32, #tpu.memory_space<vmem>>, vector<4x8x8xf32>,
    } else {
    }
    %c8_i32 = arith.constant 8 : i32
    %3 = arith.muli %arg3, %c8_i32 : i32
    %c1_i32 = arith.constant 1 : i32
    %4 = arith.addi %arg2, %c1_i32 : i32
    %c8_i32_1 = arith.constant 8 : i32
    %5 = arith.muli %4, %c8_i32_1 : i32
    %6 = arith.cmpi slt, %3, %5 : i32
    %7 = arith.extui %6 : i1 to i32
    %c0_i32_2 = arith.constant 0 : i32
    %8 = arith.cmpi ne, %7, %c0_i32_2 : i32
    scf.if %8 {
      %c0 = arith.constant 0 : index
      %c0_5 = arith.constant 0 : index
      %c0_6 = arith.constant 0 : index
      %c0_7 = arith.constant 0 : index
      %12 = vector.load %arg4[%c0, %c0_5, %c0_6, %c0_7] : memref<1x4x8x8xbf16, #tpu.memory_space<vmem>>, vector<1x4x8x8xbf16>
      %13 = vector.shape_cast %12 : vector<1x4x8x8xbf16> to vector<4x8x8xbf16>
      %c0_8 = arith.constant 0 : index
      %c0_9 = arith.constant 0 : index
      %c0_10 = arith.constant 0 : index
      %c0_11 = arith.constant 0 : index
      %14 = vector.load %arg5[%c0_8, %c0_9, %c0_10, %c0_11] : memref<1x4x8x8xbf16, #tpu.memory_space<vmem>>, vector<1x4x8x8xbf16>
      %15 = vector.shape_cast %14 : vector<1x4x8x8xbf16> to vector<4x8x8xbf16>
      %c0_12 = arith.constant 0 : index
      %c0_13 = arith.constant 0 : index
      %c0_14 = arith.constant 0 : index
      %c0_15 = arith.constant 0 : index
      %16 = vector.load %arg6[%c0_12, %c0_13, %c0_14, %c0_15] : memref<1x4x8x8xbf16, #tpu.memory_space<vmem>>, vector<1x4x8x8xbf16>
      %17 = vector.shape_cast %16 : vector<1x4x8x8xbf16> to vector<4x8x8xbf16>
      "tpu.trace_start"() <{level = 10 : i32, message = "hqd,hkd->hqk"}> : () -> ()
      %cst = arith.constant dense<0.000000e+00> : vector<4x8x8xf32>
      %18 = tpu.matmul %13, %15, %cst {dimension_numbers = #tpu.dot_dimension_numbers<[2], [2], [1], [1], [0, 0, 0, 1, 1, 1], [0], [0]>} : vector<4x8x8xbf16>, vector<4x8x8xbf16>, vector<4x8x8xf32> -> vector<4x8x8xf32>
      "tpu.trace_stop"() : () -> ()
      %c8_i32_16 = arith.constant 8 : i32
      %19 = arith.muli %arg2, %c8_i32_16 : i32
      %20 = tpu.iota {dimensions = array<i32: 0>} : vector<8x1xi32>
      %21 = vector.broadcast %19 : i32 to vector<8x1xi32>
      %22 = arith.addi %21, %20 : vector<8x1xi32>
      %c8_i32_17 = arith.constant 8 : i32
      %23 = arith.muli %arg3, %c8_i32_17 : i32
      %24 = tpu.iota {dimensions = array<i32: 1>} : vector<1x8xi32>
      %25 = vector.broadcast %23 : i32 to vector<1x8xi32>
      %26 = arith.addi %25, %24 : vector<1x8xi32>
      %c0_18 = arith.constant 0 : index
      %c0_19 = arith.constant 0 : index
      %c0_20 = arith.constant 0 : index
      %c0_21 = arith.constant 0 : index
      %27 = vector.load %arg7[%c0_18, %c0_19, %c0_20, %c0_21] : memref<1x1x1x8xf32, #tpu.memory_space<vmem>>, vector<1x1x1x8xf32>
      %28 = vector.shape_cast %27 : vector<1x1x1x8xf32> to vector<1x8xf32>
      %29 = vector.broadcast %26 : vector<1x8xi32> to vector<8x8xi32>
      %30 = vector.broadcast %22 : vector<8x1xi32> to vector<8x8xi32>
      %31 = arith.cmpi sle, %29, %30 : vector<8x8xi32>
      %32 = vector.shape_cast %28 : vector<1x8xf32> to vector<1x1x8xf32>
      %33 = vector.broadcast %32 : vector<1x1x8xf32> to vector<4x8x8xf32>
      %34 = arith.addf %18, %33 : vector<4x8x8xf32>
      %cst_22 = arith.constant -1.000000e+09 : f32
      %35 = vector.shape_cast %31 : vector<8x8xi1> to vector<1x8x8xi1>
      %36 = vector.broadcast %35 : vector<1x8x8xi1> to vector<4x8x8xi1>
      %37 = vector.broadcast %cst_22 : f32 to vector<4x8x8xf32>
      %38 = arith.select %36, %34, %37 : vector<4x8x8xi1>, vector<4x8x8xf32>
      %c0_23 = arith.constant 0 : index
      %c0_24 = arith.constant 0 : index
      %c0_25 = arith.constant 0 : index
      %39 = vector.load %arg9[%c0_23, %c0_24, %c0_25] : memref<4x8x1xf32, #tpu.memory_space<vmem>>, vector<4x8x1xf32>
      %cst_26 = arith.constant dense<0xFF800000> : vector<4x8xf32>
      %40 = vector.multi_reduction <maximumf>, %38, %cst_26 [2] : vector<4x8x8xf32> to vector<4x8xf32>
      %41 = vector.shape_cast %40 : vector<4x8xf32> to vector<4x8x1xf32>
      %42 = arith.maximumf %39, %41 : vector<4x8x1xf32>
      %43 = arith.subf %39, %42 : vector<4x8x1xf32>
      %44 = math.exp %43 : vector<4x8x1xf32>
      %45 = vector.broadcast %42 : vector<4x8x1xf32> to vector<4x8x8xf32>
      %46 = arith.subf %38, %45 : vector<4x8x8xf32>
      %47 = math.exp %46 : vector<4x8x8xf32>
      %c0_27 = arith.constant 0 : index
      %c0_28 = arith.constant 0 : index
      %c0_29 = arith.constant 0 : index
      %48 = vector.load %arg10[%c0_27, %c0_28, %c0_29] : memref<4x8x1xf32, #tpu.memory_space<vmem>>, vector<4x8x1xf32>
      %49 = arith.mulf %44, %48 : vector<4x8x1xf32>
      %cst_30 = arith.constant dense<0.000000e+00> : vector<4x8xf32>
      %50 = vector.multi_reduction <add>, %47, %cst_30 [2] : vector<4x8x8xf32> to vector<4x8xf32>
      %51 = vector.shape_cast %50 : vector<4x8xf32> to vector<4x8x1xf32>
      %52 = arith.addf %49, %51 : vector<4x8x1xf32>
      %c0_31 = arith.constant 0 : index
      %c0_32 = arith.constant 0 : index
      %c0_33 = arith.constant 0 : index
      %53 = vector.load %arg10[%c0_31, %c0_32, %c0_33] : memref<4x8x1xf32, #tpu.memory_space<vmem>>, vector<4x8x1xf32>
      tpu.vector_store %arg10[%c0_31, %c0_32, %c0_33], %52 {strides = array<i32>} : memref<4x8x1xf32, #tpu.memory_space<vmem>>, vector<4x8x1xf32>,
      %c0_34 = arith.constant 0 : index
      %c0_35 = arith.constant 0 : index
      %c0_36 = arith.constant 0 : index
      %54 = vector.load %arg11[%c0_34, %c0_35, %c0_36] : memref<4x8x8xf32, #tpu.memory_space<vmem>>, vector<4x8x8xf32>
      %55 = vector.broadcast %44 : vector<4x8x1xf32> to vector<4x8x8xf32>
      %56 = arith.mulf %55, %54 : vector<4x8x8xf32>
      %57 = arith.truncf %47 : vector<4x8x8xf32> to vector<4x8x8xbf16>
      "tpu.trace_start"() <{level = 10 : i32, message = "hqk,hkd->hqd"}> : () -> ()
      %cst_37 = arith.constant dense<0.000000e+00> : vector<4x8x8xf32>
      %58 = tpu.matmul %57, %17, %cst_37 {dimension_numbers = #tpu.dot_dimension_numbers<[2], [1], [1], [2], [0, 0, 0, 1, 1, 2], [0], [0]>} : vector<4x8x8xbf16>, vector<4x8x8xbf16>, vector<4x8x8xf32> -> vector<4x8x8xf32>
      "tpu.trace_stop"() : () -> ()
      %59 = arith.addf %56, %58 : vector<4x8x8xf32>
      %c0_38 = arith.constant 0 : index
      %c0_39 = arith.constant 0 : index
      %c0_40 = arith.constant 0 : index
      %60 = vector.load %arg11[%c0_38, %c0_39, %c0_40] : memref<4x8x8xf32, #tpu.memory_space<vmem>>, vector<4x8x8xf32>
      tpu.vector_store %arg11[%c0_38, %c0_39, %c0_40], %59 {strides = array<i32>} : memref<4x8x8xf32, #tpu.memory_space<vmem>>, vector<4x8x8xf32>,
      %c0_41 = arith.constant 0 : index
      %c0_42 = arith.constant 0 : index
      %c0_43 = arith.constant 0 : index
      %61 = vector.load %arg9[%c0_41, %c0_42, %c0_43] : memref<4x8x1xf32, #tpu.memory_space<vmem>>, vector<4x8x1xf32>
      tpu.vector_store %arg9[%c0_41, %c0_42, %c0_43], %42 {strides = array<i32>} : memref<4x8x1xf32, #tpu.memory_space<vmem>>, vector<4x8x1xf32>,
    } else {
    }
    %c0_i32_3 = arith.constant 0 : i32
    %9 = arith.cmpi eq, %arg3, %c0_i32_3 : i32
    %10 = arith.extui %9 : i1 to i32
    %c0_i32_4 = arith.constant 0 : i32
    %11 = arith.cmpi ne, %10, %c0_i32_4 : i32
    scf.if %11 {
      %c0 = arith.constant 0 : index
      %c0_5 = arith.constant 0 : index
      %c0_6 = arith.constant 0 : index
      %12 = vector.load %arg11[%c0, %c0_5, %c0_6] : memref<4x8x8xf32, #tpu.memory_space<vmem>>, vector<4x8x8xf32>
      %c0_7 = arith.constant 0 : index
      %c0_8 = arith.constant 0 : index
      %c0_9 = arith.constant 0 : index
      %13 = vector.load %arg10[%c0_7, %c0_8, %c0_9] : memref<4x8x1xf32, #tpu.memory_space<vmem>>, vector<4x8x1xf32>
      %14 = tpu.reciprocal %13 {approx = true} : vector<4x8x1xf32> -> vector<4x8x1xf32>
      %15 = vector.broadcast %14 : vector<4x8x1xf32> to vector<4x8x8xf32>
      %16 = arith.mulf %12, %15 : vector<4x8x8xf32>
      %17 = tpu.transpose %16, [1, 0, 2] : vector<4x8x8xf32> -> vector<8x4x8xf32>
      %18 = vector.shape_cast %17 : vector<8x4x8xf32> to vector<8x32xf32>
      %c0_10 = arith.constant 0 : index
      %c0_11 = arith.constant 0 : index
      %c0_12 = arith.constant 0 : index
      %19 = vector.load %arg8[%c0_10, %c0_11, %c0_12] : memref<1x8x32xf32, #tpu.memory_space<vmem>>, vector<1x8x32xf32>
      %20 = vector.shape_cast %19 : vector<1x8x32xf32> to vector<8x32xf32>
      %21 = vector.shape_cast %18 : vector<8x32xf32> to vector<1x8x32xf32>
      tpu.vector_store %arg8[%c0_10, %c0_11, %c0_12], %21 {strides = array<i32>} : memref<1x8x32xf32, #tpu.memory_space<vmem>>, vector<1x8x32xf32>,
    } else {
    }
    return
  }
  func.func @transform_0(%arg0: i32, %arg1: i32, %arg2: i32, %arg3: i32) -> (i32, i32, i32, i32) {
    %c0_i32 = arith.constant 0 : i32
    %c0_i32_0 = arith.constant 0 : i32
    return %arg0, %arg1, %arg2, %c0_i32 : i32, i32, i32, i32
  }
  func.func @transform_1(%arg0: i32, %arg1: i32, %arg2: i32, %arg3: i32) -> (i32, i32, i32, i32) {
    %c0_i32 = arith.constant 0 : i32
    %c0_i32_0 = arith.constant 0 : i32
    return %arg0, %arg1, %arg3, %c0_i32 : i32, i32, i32, i32
  }
  func.func @transform_2(%arg0: i32, %arg1: i32, %arg2: i32, %arg3: i32) -> (i32, i32, i32, i32) {
    %c0_i32 = arith.constant 0 : i32
    %c0_i32_0 = arith.constant 0 : i32
    return %arg0, %arg1, %arg3, %c0_i32 : i32, i32, i32, i32
  }
  func.func @transform_3(%arg0: i32, %arg1: i32, %arg2: i32, %arg3: i32) -> (i32, i32, i32, i32) {
    %c0_i32 = arith.constant 0 : i32
    %c0_i32_0 = arith.constant 0 : i32
    %c0_i32_1 = arith.constant 0 : i32
    return %arg0, %c0_i32, %c0_i32_0, %arg3 : i32, i32, i32, i32
  }
  func.func @transform_4(%arg0: i32, %arg1: i32, %arg2: i32, %arg3: i32) -> (i32, i32, i32) {
    %c0_i32 = arith.constant 0 : i32
    return %arg0, %arg2, %arg1 : i32, i32, i32
  }
}

</mosaic_0001>

<llo_original>
// kernel: tpu_custom_call.1
$region0: #{tpu_custom_call.1}
  #allocation0 [shape = 'u32[]', space=smem, size = 0x4, offset = 0x4, fixed_abs, tag = 'smem constant byte address 0x4 - core index']
  #allocation1 [shape = 'u32[72,128]{1,0:T(1,128)}', space=vmem, size = 0x9000, scoped, tag = 'internal scratch']
  #allocation2 [shape = 'f32[4,8,1]{2,1,0:T(8,128)}', space=vmem, size = 0x4000, scoped, tag = 'scratch operand']
  #allocation3 [shape = 'f32[4,8,1]{2,1,0:T(8,128)}', space=vmem, size = 0x4000, scoped, tag = 'scratch operand']
  #allocation4 [shape = 'f32[4,8,8]{2,1,0:T(8,128)}', space=vmem, size = 0x4000, scoped, tag = 'scratch operand']
  %s0 = inlined_call_operand.hbm [shape: bf16[2,4,8,8], index: 0, kind: input, shape index: {}]
  %s1 = inlined_call_operand.hbm [shape: bf16[2,4,8,8], index: 1, kind: input, shape index: {}]
  %s2 = inlined_call_operand.hbm [shape: bf16[2,4,8,8], index: 2, kind: input, shape index: {}]
  %s3 = inlined_call_operand.vmem [shape: f32[2,1,1,8], index: 3, kind: input, shape index: {}]
  %s4 = inlined_call_operand.hbm [shape: f32[2,8,32], index: 4, kind: output, shape index: {}]
  %s5 = sld [smem:[#allocation0]]
  $region73: #{tpu_custom_call.1} parent=0
    _
  %s7 = ssub.s32 1, %s5
  %s8 = scalar_select 0, %s7, %s5
  $region1: #{tpu_custom_call.1} parent=0
    #allocation5 [shape = 'u8[16384]{0}', space=vmem, size = 0x4000, scoped, tag = 'input window, operand 0']
    #allocation6 [shape = 's32[2]{0}', space=sflag, size = 0x8, scoped, tag = 'scoped memory for tpu_custom_call.1']
    #allocation7 [shape = 's32[2]{0}', space=sflag, size = 0x8, scoped, tag = 'scoped memory for tpu_custom_call.1']
    #allocation8 [shape = 'u8[16384]{0}', space=vmem, size = 0x4000, scoped, tag = 'input window, operand 1']
    #allocation9 [shape = 's32[2]{0}', space=sflag, size = 0x8, scoped, tag = 'scoped memory for tpu_custom_call.1']
    #allocation10 [shape = 'u8[16384]{0}', space=vmem, size = 0x4000, scoped, tag = 'input window, operand 2']
    #allocation11 [shape = 'u8[8192]{0}', space=vmem, size = 0x2000, scoped, tag = 'output window, operand 0']
    %9 = vsyncpa [#allocation6], 0
    %s10 = scalar_lea.sflag [#allocation6], 1
    %11 = vsyncpa %s10, 0
    %12 = vsyncpa [#allocation9], 0
    %s13 = scalar_lea.sflag [#allocation9], 1
    %14 = vsyncpa %s13, 0
    %15 = vsyncpa [#allocation7], 0
    %s16 = scalar_lea.sflag [#allocation7], 1
    %17 = vsyncpa %s16, 0
    loop: start=0, step=1, limit=4
    $region2: #{tpu_custom_call.1} parent=1 // loop_pre_header
      _
    $region3: #{tpu_custom_call.1} parent=1 // loop_header
      %s19 = sphi 0, %s23
      %p20 = scmp.ge.s32.totalorder %s19, 4
      %s26 = sphi 0, %s52
      %s27 = sphi 0, %s48
      %s28 = sphi 0, %s44
      %s29 = sphi 0, %s40
      %s30 = sphi 0, %s26
      %s31 = sphi 0, %s27
      %s32 = sphi 0, %s28
      %s33 = sphi 0, %s29
      %s34 = sphi 0, %s30
      %s35 = sphi 0, %s31
      %s36 = sphi 0, %s32
      %s37 = sphi 0, %s33
      %s59 = sphi 0, %s61
      %s62 = sphi 0, %s59
      %s63 = sphi 0, %s62
      %s79 = sphi 0, %s63
      %s89 = sphi 0, %s91
      %s92 = sphi 0, %s89
      %s93 = sphi 0, %s92
      %s109 = sphi 0, %s93
      %s119 = sphi 0, %s121
      %s122 = sphi 0, %s119
      %s123 = sphi 0, %s122
      %s139 = sphi 0, %s123
      %s147 = sphi 0, %s149
      %s150 = sphi 0, %s147
      %s151 = sphi 0, %s150
      %s167 = sphi 0, %s151
      %s177 = sphi 0, %s179
      %s180 = sphi 0, %s177
      %s181 = sphi 0, %s180
      %s197 = sphi 0, %s181
    $region4: #{tpu_custom_call.1} parent=1 // loop_header_branch
      %22 = sbr.rel (%p20) target = $region8
    $region5: #{tpu_custom_call.1} parent=1 // loop_body
      %s24 = ssub.s32 %s19, 1
      %s25 = ssub.s32 %s19, 2
      %s38 = sadd.s32 1, %s29
      %p39 = scmp.ge.s32.totalorder %s38, 1
      %s40 = scalar_select %p39, 0, %s38
      %s41 = sadd.s32 1, %s28
      %s42 = scalar_select %p39, %s41, %s28
      %p43 = scmp.ge.s32.totalorder %s42, 1
      %s44 = scalar_select %p43, 0, %s42
      %s45 = sadd.s32 1, %s27
      %s46 = scalar_select %p43, %s45, %s27
      %p47 = scmp.ge.s32.totalorder %s46, 1
      %s48 = scalar_select %p47, 0, %s46
      %s49 = sadd.s32 1, %s26
      %s50 = scalar_select %p47, %s49, %s26
      %p51 = scmp.ge.s32.totalorder %s50, 2
      %s52 = scalar_select %p51, 0, %s50
      %s53 = ssub.s32 %s26, %s52
      %s54 = ssub.s32 %s27, %s48
      %s55 = sor.u32 %s53, %s54
      %s56 = ssub.s32 %s28, %s44
      %s57 = sor.u32 %s55, %s56
      %p58 = scmp.eq.s32.totalorder %s57, 0
      %s60 = sadd.s32 %s59, 1
      %s61 = scalar_select %p58, %s59, %s60
      %p64 = pneg %p58
      %p65 = scmp.eq.s32.totalorder %s19, 1
      %p66 = por %p64, %p65
      %p67 = scmp.ne.s32.totalorder %s59, %s62
      %p68 = scmp.eq.s32.totalorder %s19, 0
      %p69 = por %p67, %p68
      %p70 = scmp.ne.s32.totalorder %s59, %s62
      %p71 = scmp.eq.s32.totalorder %s24, 1
      %p72 = por %p70, %p71
      %p73 = scmp.ne.s32.totalorder %s62, %s63
      %p74 = scmp.eq.s32.totalorder %s24, 0
      %p75 = por %p73, %p74
      %p76 = scmp.ne.s32.totalorder %s62, %s63
      %p77 = scmp.eq.s32.totalorder %s25, 1
      %p78 = por %p76, %p77
      %p80 = scmp.ne.s32.totalorder %s63, %s79
      %p81 = scmp.eq.s32.totalorder %s25, 0
      %p82 = por %p80, %p81
      %s83 = ssub.s32 %s26, %s52
      %s84 = ssub.s32 %s27, %s48
      %s85 = sor.u32 %s83, %s84
      %s86 = ssub.s32 %s29, %s40
      %s87 = sor.u32 %s85, %s86
      %p88 = scmp.eq.s32.totalorder %s87, 0
      %s90 = sadd.s32 %s89, 1
      %s91 = scalar_select %p88, %s89, %s90
      %p94 = pneg %p88
      %p95 = scmp.eq.s32.totalorder %s19, 1
      %p96 = por %p94, %p95
      %p97 = scmp.ne.s32.totalorder %s89, %s92
      %p98 = scmp.eq.s32.totalorder %s19, 0
      %p99 = por %p97, %p98
      %p100 = scmp.ne.s32.totalorder %s89, %s92
      %p101 = scmp.eq.s32.totalorder %s24, 1
      %p102 = por %p100, %p101
      %p103 = scmp.ne.s32.totalorder %s92, %s93
      %p104 = scmp.eq.s32.totalorder %s24, 0
      %p105 = por %p103, %p104
      %p106 = scmp.ne.s32.totalorder %s92, %s93
      %p107 = scmp.eq.s32.totalorder %s25, 1
      %p108 = por %p106, %p107
      %p110 = scmp.ne.s32.totalorder %s93, %s109
      %p111 = scmp.eq.s32.totalorder %s25, 0
      %p112 = por %p110, %p111
      %s113 = ssub.s32 %s26, %s52
      %s114 = ssub.s32 %s27, %s48
      %s115 = sor.u32 %s113, %s114
      %s116 = ssub.s32 %s29, %s40
      %s117 = sor.u32 %s115, %s116
      %p118 = scmp.eq.s32.totalorder %s117, 0
      %s120 = sadd.s32 %s119, 1
      %s121 = scalar_select %p118, %s119, %s120
      %p124 = pneg %p118
      %p125 = scmp.eq.s32.totalorder %s19, 1
      %p126 = por %p124, %p125
      %p127 = scmp.ne.s32.totalorder %s119, %s122
      %p128 = scmp.eq.s32.totalorder %s19, 0
      %p129 = por %p127, %p128
      %p130 = scmp.ne.s32.totalorder %s119, %s122
      %p131 = scmp.eq.s32.totalorder %s24, 1
      %p132 = por %p130, %p131
      %p133 = scmp.ne.s32.totalorder %s122, %s123
      %p134 = scmp.eq.s32.totalorder %s24, 0
      %p135 = por %p133, %p134
      %p136 = scmp.ne.s32.totalorder %s122, %s123
      %p137 = scmp.eq.s32.totalorder %s25, 1
      %p138 = por %p136, %p137
      %p140 = scmp.ne.s32.totalorder %s123, %s139
      %p141 = scmp.eq.s32.totalorder %s25, 0
      %p142 = por %p140, %p141
      %s143 = ssub.s32 %s26, %s52
      %s144 = ssub.s32 %s29, %s40
      %s145 = sor.u32 %s143, %s144
      %p146 = scmp.eq.s32.totalorder %s145, 0
      %s148 = sadd.s32 %s147, 1
      %s149 = scalar_select %p146, %s147, %s148
      %p152 = pneg %p146
      %p153 = scmp.eq.s32.totalorder %s19, 1
      %p154 = por %p152, %p153
      %p155 = scmp.ne.s32.totalorder %s147, %s150
      %p156 = scmp.eq.s32.totalorder %s19, 0
      %p157 = por %p155, %p156
      %p158 = scmp.ne.s32.totalorder %s147, %s150
      %p159 = scmp.eq.s32.totalorder %s24, 1
      %p160 = por %p158, %p159
      %p161 = scmp.ne.s32.totalorder %s150, %s151
      %p162 = scmp.eq.s32.totalorder %s24, 0
      %p163 = por %p161, %p162
      %p164 = scmp.ne.s32.totalorder %s150, %s151
      %p165 = scmp.eq.s32.totalorder %s25, 1
      %p166 = por %p164, %p165
      %p168 = scmp.ne.s32.totalorder %s151, %s167
      %p169 = scmp.eq.s32.totalorder %s25, 0
      %p170 = por %p168, %p169
      %s171 = ssub.s32 %s26, %s52
      %s172 = ssub.s32 %s28, %s44
      %s173 = sor.u32 %s171, %s172
      %s174 = ssub.s32 %s27, %s48
      %s175 = sor.u32 %s173, %s174
      %p176 = scmp.eq.s32.totalorder %s175, 0
      %s178 = sadd.s32 %s177, 1
      %s179 = scalar_select %p176, %s177, %s178
      %p182 = pneg %p176
      %p183 = scmp.eq.s32.totalorder %s19, 1
      %p184 = por %p182, %p183
      %p185 = scmp.ne.s32.totalorder %s177, %s180
      %p186 = scmp.eq.s32.totalorder %s19, 0
      %p187 = por %p185, %p186
      %p188 = scmp.ne.s32.totalorder %s177, %s180
      %p189 = scmp.eq.s32.totalorder %s24, 1
      %p190 = por %p188, %p189
      %p191 = scmp.ne.s32.totalorder %s180, %s181
      %p192 = scmp.eq.s32.totalorder %s24, 0
      %p193 = por %p191, %p192
      %p194 = scmp.ne.s32.totalorder %s180, %s181
      %p195 = scmp.eq.s32.totalorder %s25, 1
      %p196 = por %p194, %p195
      %p198 = scmp.ne.s32.totalorder %s181, %s197
      %p199 = scmp.eq.s32.totalorder %s25, 0
      %p200 = por %p198, %p199
      %p201 = scmp.le.s32.totalorder 1, %s19
      %p202 = scmp.lt.s32.totalorder %s19, 3
      %p203 = pnand %p201, %p202
      %p204 = pneg %p203
      // Predicated region
      $region9: #{tpu_custom_call.1} parent=5 // pred_check
        _
      $region10: #{tpu_custom_call.1} parent=5 // pred_check_branch
        %206 = sbr.rel (%p203) target = $region12
      $region11: #{tpu_custom_call.1} parent=5 // pred_region
        %s207 = ssub.s32 %s19, 1
      $region12: #{tpu_custom_call.1} parent=5 // pred_fallthru
        _
      %p208 = scmp.lt.s32.totalorder %s19, 2
      // Predicated region
      $region13: #{tpu_custom_call.1} parent=5 // pred_check
        %p209 = pneg %p208
      $region14: #{tpu_custom_call.1} parent=5 // pred_check_branch
        %211 = sbr.rel (%p209) target = $region16
      $region15: #{tpu_custom_call.1} parent=5 // pred_region
        // Predicated region
        $region17: #{tpu_custom_call.1} parent=15 // pred_check
          %p212 = pneg %p69
        $region18: #{tpu_custom_call.1} parent=15 // pred_check_branch
          %214 = sbr.rel (%p212) target = $region20
        $region19: #{tpu_custom_call.1} parent=15 // pred_region
          %s215 = sand.u32 %s59, 1
          %s216 = scalar_lea.sflag [#allocation6], %s215
          %s217 = sand.u32 %s59, 1
          %s218 = smul.addr %s217, 16
          %s219 = scalar_lea.vmem [#allocation5], %s218
          %s220 = smul.u32 4, %s27
          %222 = vsyncadd %s216, 0
          %s223 = sadd.s32 %s28, %s220
          %s224 = smul.addr %s26, 4
          %s225 = sadd.s32 %s223, %s224
          %s226 = smul.addr %s225, 4
          %s227 = scalar_lea.hbm %s0, %s226
          %s228 = sshll.u32 %s227, 4
          %s229 = int_to_ptr.hbm [resolvable:$true] %s228
          %s230 = sshll.u32 %s219, 4
          %s231 = int_to_ptr.vmem [resolvable:$true] %s230
          %236 = dma.hbm_to_vmem [thread:$0]  %s229, 256, %s231, %s216, 64, 64, 4
        $region20: #{tpu_custom_call.1} parent=15 // pred_fallthru
          _
        // Predicated region
        $region21: #{tpu_custom_call.1} parent=15 // pred_check
          %p237 = pneg %p99
        $region22: #{tpu_custom_call.1} parent=15 // pred_check_branch
          %239 = sbr.rel (%p237) target = $region24
        $region23: #{tpu_custom_call.1} parent=15 // pred_region
          %s240 = sand.u32 %s19, 1
          %s241 = scalar_lea.sflag [#allocation9], %s240
          %s242 = sand.u32 %s89, 1
          %s243 = smul.addr %s242, 16
          %s244 = scalar_lea.vmem [#allocation8], %s243
          %s245 = smul.u32 4, %s27
          %247 = vsyncadd %s241, 0
          %s248 = sadd.s32 %s29, %s245
          %s249 = smul.addr %s26, 4
          %s250 = sadd.s32 %s248, %s249
          %s251 = smul.addr %s250, 4
          %s252 = scalar_lea.hbm %s1, %s251
          %s253 = sshll.u32 %s252, 4
          %s254 = int_to_ptr.hbm [resolvable:$true] %s253
          %s255 = sshll.u32 %s244, 4
          %s256 = int_to_ptr.vmem [resolvable:$true] %s255
          %261 = dma.hbm_to_vmem [thread:$0]  %s254, 256, %s256, %s241, 64, 64, 4
        $region24: #{tpu_custom_call.1} parent=15 // pred_fallthru
          _
        // Predicated region
        $region25: #{tpu_custom_call.1} parent=15 // pred_check
          %p262 = pneg %p129
        $region26: #{tpu_custom_call.1} parent=15 // pred_check_branch
          %264 = sbr.rel (%p262) target = $region28
        $region27: #{tpu_custom_call.1} parent=15 // pred_region
          %s265 = sand.u32 %s19, 1
          %s266 = scalar_lea.sflag [#allocation9], %s265
          %s267 = sand.u32 %s119, 1
          %s268 = smul.addr %s267, 16
          %s269 = scalar_lea.vmem [#allocation10], %s268
          %s270 = smul.u32 4, %s27
          %272 = vsyncadd %s266, 0
          %s273 = sadd.s32 %s29, %s270
          %s274 = smul.addr %s26, 4
          %s275 = sadd.s32 %s273, %s274
          %s276 = smul.addr %s275, 4
          %s277 = scalar_lea.hbm %s2, %s276
          %s278 = sshll.u32 %s277, 4
          %s279 = int_to_ptr.hbm [resolvable:$true] %s278
          %s280 = sshll.u32 %s269, 4
          %s281 = int_to_ptr.vmem [resolvable:$true] %s280
          %286 = dma.hbm_to_vmem [thread:$0]  %s279, 256, %s281, %s266, 64, 64, 4
        $region28: #{tpu_custom_call.1} parent=15 // pred_fallthru
          _
        // Predicated region
        $region29: #{tpu_custom_call.1} parent=15 // pred_check
          %p287 = pneg %p157
        $region30: #{tpu_custom_call.1} parent=15 // pred_check_branch
          %289 = sbr.rel (%p287) target = $region32
        $region31: #{tpu_custom_call.1} parent=15 // pred_region
          %p290 = scmp.lt.s32.totalorder %s26, 1
          %s291 = scalar_select %p290, %s26, 1
          %p292 = scmp.lt.s32.totalorder %s29, 0
          %s293 = scalar_select %p292, %s29, 0
          %s294 = sadd.s32 %s293, %s291
          %s295 = scalar_lea.vmem %s3, %s294
        $region32: #{tpu_custom_call.1} parent=15 // pred_fallthru
          _
      $region16: #{tpu_custom_call.1} parent=5 // pred_fallthru
        _
      %p296 = scmp.le.s32.totalorder 1, %s19
      %p297 = scmp.lt.s32.totalorder %s19, 3
      %p298 = pnand %p296, %p297
      %p299 = pneg %p298
      // Predicated region
      $region33: #{tpu_custom_call.1} parent=5 // pred_check
        _
      $region34: #{tpu_custom_call.1} parent=5 // pred_check_branch
        %301 = sbr.rel (%p298) target = $region36
      $region35: #{tpu_custom_call.1} parent=5 // pred_region
        %s302 = ssub.s32 %s19, 1
        %s303 = sand.u32 %s62, 1
        %s304 = scalar_lea.sflag [#allocation6], %s303
        %s305 = sand.u32 %s62, 1
        %s306 = smul.addr %s305, 16
        %s307 = scalar_lea.vmem [#allocation5], %s306
        // Predicated region
        $region37: #{tpu_custom_call.1} parent=35 // pred_check
          %p308 = pneg %p75
        $region38: #{tpu_custom_call.1} parent=35 // pred_check_branch
          %310 = sbr.rel (%p308) target = $region40
        $region39: #{tpu_custom_call.1} parent=35 // pred_region
          %312 = dma.done %s304, 256
        $region40: #{tpu_custom_call.1} parent=35 // pred_fallthru
          _
        %s313 = sand.u32 %s24, 1
        %s314 = scalar_lea.sflag [#allocation9], %s313
        %s315 = sand.u32 %s92, 1
        %s316 = smul.addr %s315, 16
        %s317 = scalar_lea.vmem [#allocation8], %s316
        // Predicated region
        $region41: #{tpu_custom_call.1} parent=35 // pred_check
          %p318 = pneg %p105
        $region42: #{tpu_custom_call.1} parent=35 // pred_check_branch
          %320 = sbr.rel (%p318) target = $region44
        $region43: #{tpu_custom_call.1} parent=35 // pred_region
          %322 = dma.done %s314, 256
        $region44: #{tpu_custom_call.1} parent=35 // pred_fallthru
          _
        %s323 = sand.u32 %s24, 1
        %s324 = scalar_lea.sflag [#allocation9], %s323
        %s325 = sand.u32 %s122, 1
        %s326 = smul.addr %s325, 16
        %s327 = scalar_lea.vmem [#allocation10], %s326
        // Predicated region
        $region45: #{tpu_custom_call.1} parent=35 // pred_check
          %p328 = pneg %p135
        $region46: #{tpu_custom_call.1} parent=35 // pred_check_branch
          %330 = sbr.rel (%p328) target = $region48
        $region47: #{tpu_custom_call.1} parent=35 // pred_region
          %332 = dma.done %s324, 256
        $region48: #{tpu_custom_call.1} parent=35 // pred_fallthru
          _
        %s333 = sand.u32 %s62, 1
        %s334 = scalar_lea.sflag [#allocation6], %s333
        %s335 = sand.u32 %s62, 1
        %s336 = smul.addr %s335, 16
        %s337 = scalar_lea.vmem [#allocation5], %s336
        %p338 = pneg %p75
        %p339 = pneg %p72
        %s340 = sand.u32 %s24, 1
        %s341 = scalar_lea.sflag [#allocation9], %s340
        %s342 = sand.u32 %s92, 1
        %s343 = smul.addr %s342, 16
        %s344 = scalar_lea.vmem [#allocation8], %s343
        %p345 = pneg %p105
        %p346 = pneg %p102
        %s347 = sand.u32 %s24, 1
        %s348 = scalar_lea.sflag [#allocation9], %s347
        %s349 = sand.u32 %s122, 1
        %s350 = smul.addr %s349, 16
        %s351 = scalar_lea.vmem [#allocation10], %s350
        %p352 = pneg %p135
        %p353 = pneg %p132
        %p354 = scmp.lt.s32.totalorder %s30, 1
        %s355 = scalar_select %p354, %s30, 1
        %p356 = scmp.lt.s32.totalorder %s33, 0
        %s357 = scalar_select %p356, %s33, 0
        %s358 = sadd.s32 %s357, %s355
        %s359 = scalar_lea.vmem %s3, %s358
        %p360 = pneg %p163
        %p361 = pneg %p160
        %p362 = pneg %p193
        %p363 = pneg %p190
        %s364 = sand.u32 %s180, 1
        %s365 = scalar_lea.sflag [#allocation7], %s364
        %s366 = sand.u32 %s180, 1
        %s367 = smul.addr %s366, 8
        %s368 = scalar_lea.vmem [#allocation11], %s367
        %s369 = smul.u32 4, %s31
        %s370 = smul.u32 4, %s31
        %s371 = smul.u32 4, %s31
        %p372 = scmp.lt.s32.totalorder %s30, 1
        %s373 = scalar_select %p372, %s30, 1
        %p374 = scmp.lt.s32.totalorder %s33, 0
        %s375 = scalar_select %p374, %s33, 0
        %s376 = sadd.s32 %s375, %s373
        %s377 = scalar_lea.vmem %s3, %s376
        %p379 = scmp.eq.s32.totalorder %s33, 0
        // Predicated region
        $region49: #{tpu_custom_call.1} parent=35 // pred_check
          %p380 = pneg %p379
        $region50: #{tpu_custom_call.1} parent=35 // pred_check_branch
          %382 = sbr.rel (%p380) target = $region52
        $region51: #{tpu_custom_call.1} parent=35 // pred_region
          %vm383 = vcmask 7168
          %384 = vst.msk [vmem:[#allocation2] sm:$0xff] %vm383, -inf
          %385 = vst.msk [vmem:[#allocation2 + $0x8] sm:$0xff] %vm383, -inf
          %386 = vst.msk [vmem:[#allocation2 + $0x10] sm:$0xff] %vm383, -inf
          %387 = vst.msk [vmem:[#allocation2 + $0x18] sm:$0xff] %vm383, -inf
          %388 = vst.msk [vmem:[#allocation3] sm:$0xff] %vm383, 0.0
          %389 = vst.msk [vmem:[#allocation3 + $0x8] sm:$0xff] %vm383, 0.0
          %390 = vst.msk [vmem:[#allocation3 + $0x10] sm:$0xff] %vm383, 0.0
          %391 = vst.msk [vmem:[#allocation3 + $0x18] sm:$0xff] %vm383, 0.0
          %vm392 = vcmask 64512
          %393 = vst.msk [vmem:[#allocation4] sm:$0xff] %vm392, 0.0
          %394 = vst.msk [vmem:[#allocation4 + $0x8] sm:$0xff] %vm392, 0.0
          %395 = vst.msk [vmem:[#allocation4 + $0x10] sm:$0xff] %vm392, 0.0
          %396 = vst.msk [vmem:[#allocation4 + $0x18] sm:$0xff] %vm392, 0.0
        $region52: #{tpu_custom_call.1} parent=35 // pred_fallthru
          _
        %s397 = smul.u32 %s33, 8
        %s398 = sadd.s32 %s32, 1
        %s399 = smul.u32 %s398, 8
        %p400 = scmp.lt.s32.totalorder %s397, %s399
        // Predicated region
        $region53: #{tpu_custom_call.1} parent=35 // pred_check
          %p401 = pneg %p400
        $region54: #{tpu_custom_call.1} parent=35 // pred_check_branch
          %403 = sbr.rel (%p401) target = $region56
        $region55: #{tpu_custom_call.1} parent=35 // pred_region
          %v404 = vld [vmem:[%s307] sm:$0xf]
          %v405 = vld [vmem:[%s307 + $0x4] sm:$0xf]
          %v406 = vld [vmem:[%s307 + $0x8] sm:$0xf]
          %v407 = vld [vmem:[%s307 + $0xc] sm:$0xf]
          %v408 = vld [vmem:[%s317] sm:$0xf]
          %v409 = vld [vmem:[%s317 + $0x4] sm:$0xf]
          %v410 = vld [vmem:[%s317 + $0x8] sm:$0xf]
          %v411 = vld [vmem:[%s317 + $0xc] sm:$0xf]
          %v412 = vld [vmem:[%s327] sm:$0xf]
          %v413 = vld [vmem:[%s327 + $0x4] sm:$0xf]
          %v414 = vld [vmem:[%s327 + $0x8] sm:$0xf]
          %v415 = vld [vmem:[%s327 + $0xc] sm:$0xf]
          %s416 = smul.u32 %s32, 8
          %v417 = vlaneseq
          %v418 = vshrl.u32 %v417, 7
          %v419 = vstv %s416
          %v420 = vadd.s32 %v419, %v418
          %v421 = vlaneseq
          %v422 = vand.u32 %v421, 127
          %v423 = vstv %s397
          %v424 = vadd.s32 %v423, %v422
          %v425 = vld [vmem:[%s377] sm:$0x1]
          %vm426 = vcmp.le.s32.totalorder %v424, %v420
          %v428 = vperm.slane %v425, 0
          %vm430 = vcmask 64512
          %v432 = vsel %vm430, %v404, 0
          %v435 = vsel %vm430, %v408, 0
          %437 = vmatpush.bf16.xpose.msra.mxu0 0
          %438 = vmatpush.bf16.xpose.msra.mxu0 0
          %439 = vmatpush.bf16.xpose.msra.mxu0 0
          %440 = vmatpush.bf16.xpose.msra.mxu0 0
          %441 = vmatpush.bf16.xpose.msra.mxu0 0
          %442 = vmatpush.bf16.xpose.msra.mxu0 0
          %443 = vmatpush.bf16.xpose.msra.mxu0 0
          %444 = vmatpush.bf16.xpose.msra.mxu0 %v435
          %445 = vmatmul.bf16.gmra.mxu0 %v432
          %v446 = vpop.f32.mrf.mxu0
          %v447 = vadd.f32 %v428, %v446
          %v448 = vpop.f32.mrf.mxu0
          %449 = vdwg.mxu0
          %v451 = vsel %vm430, %v405, 0
          %v454 = vsel %vm430, %v409, 0
          %456 = vmatpush.bf16.xpose.msra.mxu0 0
          %457 = vmatpush.bf16.xpose.msra.mxu0 0
          %458 = vmatpush.bf16.xpose.msra.mxu0 0
          %459 = vmatpush.bf16.xpose.msra.mxu0 0
          %460 = vmatpush.bf16.xpose.msra.mxu0 0
          %461 = vmatpush.bf16.xpose.msra.mxu0 0
          %462 = vmatpush.bf16.xpose.msra.mxu0 0
          %463 = vmatpush.bf16.xpose.msra.mxu0 %v454
          %464 = vmatmul.bf16.gmra.mxu0 %v451
          %v465 = vpop.f32.mrf.mxu0
          %v466 = vadd.f32 %v428, %v465
          %v467 = vpop.f32.mrf.mxu0
          %468 = vdwg.mxu0
          %v470 = vsel %vm430, %v406, 0
          %v473 = vsel %vm430, %v410, 0
          %475 = vmatpush.bf16.xpose.msra.mxu0 0
          %476 = vmatpush.bf16.xpose.msra.mxu0 0
          %477 = vmatpush.bf16.xpose.msra.mxu0 0
          %478 = vmatpush.bf16.xpose.msra.mxu0 0
          %479 = vmatpush.bf16.xpose.msra.mxu0 0
          %480 = vmatpush.bf16.xpose.msra.mxu0 0
          %481 = vmatpush.bf16.xpose.msra.mxu0 0
          %482 = vmatpush.bf16.xpose.msra.mxu0 %v473
          %483 = vmatmul.bf16.gmra.mxu0 %v470
          %v484 = vpop.f32.mrf.mxu0
          %v485 = vadd.f32 %v428, %v484
          %v486 = vpop.f32.mrf.mxu0
          %487 = vdwg.mxu0
          %v489 = vsel %vm430, %v407, 0
          %v492 = vsel %vm430, %v411, 0
          %494 = vmatpush.bf16.xpose.msra.mxu0 0
          %495 = vmatpush.bf16.xpose.msra.mxu0 0
          %496 = vmatpush.bf16.xpose.msra.mxu0 0
          %497 = vmatpush.bf16.xpose.msra.mxu0 0
          %498 = vmatpush.bf16.xpose.msra.mxu0 0
          %499 = vmatpush.bf16.xpose.msra.mxu0 0
          %500 = vmatpush.bf16.xpose.msra.mxu0 0
          %501 = vmatpush.bf16.xpose.msra.mxu0 %v492
          %502 = vmatmul.bf16.gmra.mxu0 %v489
          %v503 = vpop.f32.mrf.mxu0
          %v504 = vadd.f32 %v428, %v503
          %v505 = vpop.f32.mrf.mxu0
          %506 = vdwg.mxu0
          %v507 = vsel %vm426, 1, 0
          %vm508 = vcmp.eq.s32.totalorder %v507, 1
          %v509 = vsel %vm508, %v447, -1e+09
          %v510 = vsel %vm508, %v466, -1e+09
          %v511 = vsel %vm508, %v485, -1e+09
          %v512 = vsel %vm508, %v504, -1e+09
          %v513 = vld [vmem:[#allocation2] sm:$0xff]
          %v514 = vld [vmem:[#allocation2 + $0x8] sm:$0xff]
          %v515 = vld [vmem:[#allocation2 + $0x10] sm:$0xff]
          %v516 = vld [vmem:[#allocation2 + $0x18] sm:$0xff]
          %v517 = vsel %vm430, %v509, -inf
          %518 = vmax.xlane.f32.xlu0 %v517
          %v519 = vpop.xlane.xlu0 %518
          %v520 = vsel %vm430, %v510, -inf
          %521 = vmax.xlane.f32.xlu0 %v520
          %v522 = vpop.xlane.xlu0 %521
          %v523 = vsel %vm430, %v511, -inf
          %524 = vmax.xlane.f32.xlu0 %v523
          %v525 = vpop.xlane.xlu0 %524
          %v526 = vsel %vm430, %v512, -inf
          %527 = vmax.xlane.f32.xlu0 %v526
          %v528 = vpop.xlane.xlu0 %527
          %v529 = vmax.f32 %v513, %v519
          %v530 = vmax.f32 %v514, %v522
          %v531 = vmax.f32 %v515, %v525
          %v532 = vmax.f32 %v516, %v528
          %v533 = vsub.f32 %v513, %v529
          %v534 = vsub.f32 %v514, %v530
          %v535 = vsub.f32 %v515, %v531
          %v536 = vsub.f32 %v516, %v532
          %v537 = vmul.f32 %v533, 1.442695
          %v538 = vpow.pop %v537
          %v539 = vmul.f32 %v534, 1.442695
          %v540 = vpow.pop %v539
          %v541 = vmul.f32 %v535, 1.442695
          %v542 = vpow.pop %v541
          %v543 = vmul.f32 %v536, 1.442695
          %v544 = vpow.pop %v543
          %546 = vset.pattern.permute.xlu0 0
          %547 = vperm.xlu0 %546, %v529
          %v548 = vpop.permute.xlu0 %547
          %551 = vset.pattern.permute.xlu0 0
          %552 = vperm.xlu0 %551, %v530
          %v553 = vpop.permute.xlu0 %552
          %556 = vset.pattern.permute.xlu0 0
          %557 = vperm.xlu0 %556, %v531
          %v558 = vpop.permute.xlu0 %557
          %561 = vset.pattern.permute.xlu0 0
          %562 = vperm.xlu0 %561, %v532
          %v563 = vpop.permute.xlu0 %562
          %v565 = vsub.f32 %v509, %v548
          %v566 = vsub.f32 %v510, %v553
          %v567 = vsub.f32 %v511, %v558
          %v568 = vsub.f32 %v512, %v563
          %v569 = vmul.f32 %v565, 1.442695
          %v570 = vpow.pop %v569
          %v571 = vmul.f32 %v566, 1.442695
          %v572 = vpow.pop %v571
          %v573 = vmul.f32 %v567, 1.442695
          %v574 = vpow.pop %v573
          %v575 = vmul.f32 %v568, 1.442695
          %v576 = vpow.pop %v575
          %v577 = vld [vmem:[#allocation3] sm:$0xff]
          %v578 = vld [vmem:[#allocation3 + $0x8] sm:$0xff]
          %v579 = vld [vmem:[#allocation3 + $0x10] sm:$0xff]
          %v580 = vld [vmem:[#allocation3 + $0x18] sm:$0xff]
          %v581 = vmul.f32 %v538, %v577
          %v582 = vmul.f32 %v540, %v578
          %v583 = vmul.f32 %v542, %v579
          %v584 = vmul.f32 %v544, %v580
          %v585 = vsel %vm430, %v570, 0.0
          %586 = vadd.xlane.f32.xlu0 %v585
          %v587 = vpop.xlane.xlu0 %586
          %v588 = vsel %vm430, %v572, 0.0
          %589 = vadd.xlane.f32.xlu0 %v588
          %v590 = vpop.xlane.xlu0 %589
          %v591 = vsel %vm430, %v574, 0.0
          %592 = vadd.xlane.f32.xlu0 %v591
          %v593 = vpop.xlane.xlu0 %592
          %v594 = vsel %vm430, %v576, 0.0
          %595 = vadd.xlane.f32.xlu0 %v594
          %v596 = vpop.xlane.xlu0 %595
          %v597 = vadd.f32 %v581, %v587
          %v598 = vadd.f32 %v582, %v590
          %v599 = vadd.f32 %v583, %v593
          %v600 = vadd.f32 %v584, %v596
          %vm601 = vcmask 7168
          %602 = vst.msk [vmem:[#allocation3] sm:$0xff] %vm601, %v597
          %603 = vst.msk [vmem:[#allocation3 + $0x8] sm:$0xff] %vm601, %v598
          %604 = vst.msk [vmem:[#allocation3 + $0x10] sm:$0xff] %vm601, %v599
          %605 = vst.msk [vmem:[#allocation3 + $0x18] sm:$0xff] %vm601, %v600
          %v606 = vld [vmem:[#allocation4] sm:$0xff]
          %v607 = vld [vmem:[#allocation4 + $0x8] sm:$0xff]
          %v608 = vld [vmem:[#allocation4 + $0x10] sm:$0xff]
          %v609 = vld [vmem:[#allocation4 + $0x18] sm:$0xff]
          %611 = vset.pattern.permute.xlu0 0
          %612 = vperm.xlu0 %611, %v538
          %v613 = vpop.permute.xlu0 %612
          %616 = vset.pattern.permute.xlu0 0
          %617 = vperm.xlu0 %616, %v540
          %v618 = vpop.permute.xlu0 %617
          %621 = vset.pattern.permute.xlu0 0
          %622 = vperm.xlu0 %621, %v542
          %v623 = vpop.permute.xlu0 %622
          %626 = vset.pattern.permute.xlu0 0
          %627 = vperm.xlu0 %626, %v544
          %v628 = vpop.permute.xlu0 %627
          %v630 = vmul.f32 %v613, %v606
          %v631 = vmul.f32 %v618, %v607
          %v632 = vmul.f32 %v623, %v608
          %v633 = vmul.f32 %v628, %v609
          %v634 = vpack.c.bf16 %v570, %v570
          %v635 = vpack.c.bf16 %v572, %v572
          %v636 = vpack.c.bf16 %v574, %v574
          %v637 = vpack.c.bf16 %v576, %v576
          %v639 = vsel %vm430, %v634, 0
          %vm641 = vcmask 1043456
          %v643 = vsel %vm641, %v412, 0
          %645 = vmatpush.bf16.msra.mxu0 0
          %646 = vmatpush.bf16.msra.mxu0 0
          %647 = vmatpush.bf16.msra.mxu0 0
          %648 = vmatpush.bf16.msra.mxu0 0
          %649 = vmatpush.bf16.msra.mxu0 0
          %650 = vmatpush.bf16.msra.mxu0 0
          %651 = vmatpush.bf16.msra.mxu0 0
          %652 = vmatpush.bf16.msra.mxu0 %v643
          %653 = vmatmul.bf16.gmra.mxu0 %v639
          %v654 = vpop.f32.mrf.mxu0
          %v655 = vadd.f32 0.0, %v654
          %v656 = vpop.f32.mrf.mxu0
          %657 = vdwg.mxu0
          %v659 = vsel %vm430, %v635, 0
          %v662 = vsel %vm641, %v413, 0
          %664 = vmatpush.bf16.msra.mxu0 0
          %665 = vmatpush.bf16.msra.mxu0 0
          %666 = vmatpush.bf16.msra.mxu0 0
          %667 = vmatpush.bf16.msra.mxu0 0
          %668 = vmatpush.bf16.msra.mxu0 0
          %669 = vmatpush.bf16.msra.mxu0 0
          %670 = vmatpush.bf16.msra.mxu0 0
          %671 = vmatpush.bf16.msra.mxu0 %v662
          %672 = vmatmul.bf16.gmra.mxu0 %v659
          %v673 = vpop.f32.mrf.mxu0
          %v674 = vadd.f32 0.0, %v673
          %v675 = vpop.f32.mrf.mxu0
          %676 = vdwg.mxu0
          %v678 = vsel %vm430, %v636, 0
          %v681 = vsel %vm641, %v414, 0
          %683 = vmatpush.bf16.msra.mxu0 0
          %684 = vmatpush.bf16.msra.mxu0 0
          %685 = vmatpush.bf16.msra.mxu0 0
          %686 = vmatpush.bf16.msra.mxu0 0
          %687 = vmatpush.bf16.msra.mxu0 0
          %688 = vmatpush.bf16.msra.mxu0 0
          %689 = vmatpush.bf16.msra.mxu0 0
          %690 = vmatpush.bf16.msra.mxu0 %v681
          %691 = vmatmul.bf16.gmra.mxu0 %v678
          %v692 = vpop.f32.mrf.mxu0
          %v693 = vadd.f32 0.0, %v692
          %v694 = vpop.f32.mrf.mxu0
          %695 = vdwg.mxu0
          %v697 = vsel %vm430, %v637, 0
          %v700 = vsel %vm641, %v415, 0
          %702 = vmatpush.bf16.msra.mxu0 0
          %703 = vmatpush.bf16.msra.mxu0 0
          %704 = vmatpush.bf16.msra.mxu0 0
          %705 = vmatpush.bf16.msra.mxu0 0
          %706 = vmatpush.bf16.msra.mxu0 0
          %707 = vmatpush.bf16.msra.mxu0 0
          %708 = vmatpush.bf16.msra.mxu0 0
          %709 = vmatpush.bf16.msra.mxu0 %v700
          %710 = vmatmul.bf16.gmra.mxu0 %v697
          %v711 = vpop.f32.mrf.mxu0
          %v712 = vadd.f32 0.0, %v711
          %v713 = vpop.f32.mrf.mxu0
          %714 = vdwg.mxu0
          %v715 = vadd.f32 %v630, %v655
          %v716 = vadd.f32 %v631, %v674
          %v717 = vadd.f32 %v632, %v693
          %v718 = vadd.f32 %v633, %v712
          %719 = vst.msk [vmem:[#allocation4] sm:$0xff] %vm430, %v715
          %720 = vst.msk [vmem:[#allocation4 + $0x8] sm:$0xff] %vm430, %v716
          %721 = vst.msk [vmem:[#allocation4 + $0x10] sm:$0xff] %vm430, %v717
          %722 = vst.msk [vmem:[#allocation4 + $0x18] sm:$0xff] %vm430, %v718
          %723 = vst.msk [vmem:[#allocation2] sm:$0xff] %vm601, %v529
          %724 = vst.msk [vmem:[#allocation2 + $0x8] sm:$0xff] %vm601, %v530
          %725 = vst.msk [vmem:[#allocation2 + $0x10] sm:$0xff] %vm601, %v531
          %726 = vst.msk [vmem:[#allocation2 + $0x18] sm:$0xff] %vm601, %v532
        $region56: #{tpu_custom_call.1} parent=35 // pred_fallthru
          _
        // Predicated region
        $region57: #{tpu_custom_call.1} parent=35 // pred_check
          %p727 = pneg %p379
        $region58: #{tpu_custom_call.1} parent=35 // pred_check_branch
          %729 = sbr.rel (%p727) target = $region60
        $region59: #{tpu_custom_call.1} parent=35 // pred_region
          %v730 = vld [vmem:[#allocation4] sm:$0xff]
          %v731 = vld [vmem:[#allocation4 + $0x8] sm:$0xff]
          %v732 = vld [vmem:[#allocation4 + $0x10] sm:$0xff]
          %v733 = vld [vmem:[#allocation4 + $0x18] sm:$0xff]
          %v734 = vld [vmem:[#allocation3] sm:$0xff]
          %v735 = vld [vmem:[#allocation3 + $0x8] sm:$0xff]
          %v736 = vld [vmem:[#allocation3 + $0x10] sm:$0xff]
          %v737 = vld [vmem:[#allocation3 + $0x18] sm:$0xff]
          %v738 = vrcp.pop %v734
          %v739 = vrcp.pop %v735
          %v740 = vrcp.pop %v736
          %v741 = vrcp.pop %v737
          %743 = vset.pattern.permute.xlu0 0
          %744 = vperm.xlu0 %743, %v738
          %v745 = vpop.permute.xlu0 %744
          %748 = vset.pattern.permute.xlu0 0
          %749 = vperm.xlu0 %748, %v739
          %v750 = vpop.permute.xlu0 %749
          %753 = vset.pattern.permute.xlu0 0
          %754 = vperm.xlu0 %753, %v740
          %v755 = vpop.permute.xlu0 %754
          %758 = vset.pattern.permute.xlu0 0
          %759 = vperm.xlu0 %758, %v741
          %v760 = vpop.permute.xlu0 %759
          %v762 = vmul.f32 %v730, %v745
          %v763 = vmul.f32 %v731, %v750
          %v764 = vmul.f32 %v732, %v755
          %v765 = vmul.f32 %v733, %v760
          %v766 = vrot.slane %v764, 4
          %vm767 = vcmask 1047556
          %v768 = vsel %vm767, %v766, %v762
          %v769 = vrot.slane %v762, 4
          %v770 = vsel %vm767, %v764, %v769
          %v772 = vunpack.c.l.s4 1983009808
          %v773 = vunpack.c.0.s8 %v772
          %v774 = vperm.slane %v768, %v773
          %v776 = vunpack.c.l.s4 1983009808
          %v777 = vunpack.c.0.s8 %v776
          %v778 = vperm.slane %v770, %v777
          %v779 = vrot.slane %v765, 4
          %v780 = vsel %vm767, %v779, %v763
          %v781 = vrot.slane %v763, 4
          %v782 = vsel %vm767, %v765, %v781
          %v784 = vunpack.c.l.s4 1983009808
          %v785 = vunpack.c.0.s8 %v784
          %v786 = vperm.slane %v780, %v785
          %v788 = vunpack.c.l.s4 1983009808
          %v789 = vunpack.c.0.s8 %v788
          %v790 = vperm.slane %v782, %v789
          %v791 = vrot.slane %v786, 4
          %v792 = vsel %vm767, %v791, %v774
          %v793 = vrot.slane %v774, 4
          %v794 = vsel %vm767, %v786, %v793
          %v796 = vunpack.c.l.s4 1934713408
          %v797 = vunpack.c.0.s8 %v796
          %v798 = vperm.slane %v792, %v797
          %v800 = vunpack.c.l.s4 1934713408
          %v801 = vunpack.c.0.s8 %v800
          %v802 = vperm.slane %v794, %v801
          %v803 = vrot.slane %v790, 4
          %v804 = vsel %vm767, %v803, %v778
          %v805 = vrot.slane %v778, 4
          %v806 = vsel %vm767, %v790, %v805
          %v808 = vunpack.c.l.s4 1934713408
          %v809 = vunpack.c.0.s8 %v808
          %v810 = vperm.slane %v804, %v809
          %v812 = vunpack.c.l.s4 1934713408
          %v813 = vunpack.c.0.s8 %v812
          %v814 = vperm.slane %v806, %v813
          %v815 = vrot.slane %v798, 4
          %v816 = vsel %vm767, 0.0, %v815
          %v817 = vrot.slane %v802, 4
          %v818 = vsel %vm767, 0.0, %v817
          %v819 = vrot.slane %v810, 4
          %v820 = vsel %vm767, 0.0, %v819
          %v821 = vrot.slane %v814, 4
          %v822 = vsel %vm767, 0.0, %v821
          %v823 = vsel %vm767, %v817, %v798
          %v825 = vunpack.c.l.s4 1983009808
          %v826 = vunpack.c.0.s8 %v825
          %v827 = vperm.slane %v823, %v826
          %v828 = vrot.slane %v818, 4
          %v829 = vsel %vm767, %v828, %v816
          %v831 = vunpack.c.l.s4 1983009808
          %v832 = vunpack.c.0.s8 %v831
          %v833 = vperm.slane %v829, %v832
          %v834 = vsel %vm767, %v821, %v810
          %v836 = vunpack.c.l.s4 1983009808
          %v837 = vunpack.c.0.s8 %v836
          %v838 = vperm.slane %v834, %v837
          %v839 = vrot.slane %v822, 4
          %v840 = vsel %vm767, %v839, %v820
          %v842 = vunpack.c.l.s4 1983009808
          %v843 = vunpack.c.0.s8 %v842
          %v844 = vperm.slane %v840, %v843
          %v845 = vrot.slane %v833, 4
          %v846 = vsel %vm767, %v845, %v827
          %v847 = vrot.slane %v827, 4
          %v848 = vsel %vm767, %v833, %v847
          %v850 = vunpack.c.l.s4 1934713408
          %v851 = vunpack.c.0.s8 %v850
          %v852 = vperm.slane %v846, %v851
          %v854 = vunpack.c.l.s4 1934713408
          %v855 = vunpack.c.0.s8 %v854
          %v856 = vperm.slane %v848, %v855
          %v857 = vrot.slane %v844, 4
          %v858 = vsel %vm767, %v857, %v838
          %v859 = vrot.slane %v838, 4
          %v860 = vsel %vm767, %v844, %v859
          %v862 = vunpack.c.l.s4 1934713408
          %v863 = vunpack.c.0.s8 %v862
          %v864 = vperm.slane %v858, %v863
          %v866 = vunpack.c.l.s4 1934713408
          %v867 = vunpack.c.0.s8 %v866
          %v868 = vperm.slane %v860, %v867
          %v869 = vrot.slane %v864, 4
          %v870 = vsel %vm767, %v869, %v852
          %v871 = vrot.slane %v852, 4
          %v872 = vsel %vm767, %v864, %v871
          %v873 = vrot.slane %v868, 4
          %v874 = vsel %vm767, %v873, %v856
          %v875 = vrot.slane %v856, 4
          %v876 = vsel %vm767, %v868, %v875
          %878 = vrot.lane.b32.xlu0 %v872, 8
          %v879 = vpop.permute.xlu0 %878
          %882 = vrot.lane.b32.xlu0 %v874, 16
          %v883 = vpop.permute.xlu0 %882
          %886 = vrot.lane.b32.xlu0 %v876, 24
          %v887 = vpop.permute.xlu0 %886
          %vm889 = vcmask 64512
          %v890 = vsel %vm889, %v870, %v879
          %vm891 = vcmask 130048
          %v892 = vsel %vm891, %v890, %v883
          %vm893 = vcmask 195584
          %v894 = vsel %vm893, %v892, %v887
          %vm895 = vcmask 261120
          %896 = vst.msk [vmem:[%s368] sm:$0xff] %vm895, %v894
        $region60: #{tpu_custom_call.1} parent=35 // pred_fallthru
          _
        %s897 = sand.u32 %s180, 1
        %s898 = scalar_lea.sflag [#allocation7], %s897
        %s899 = sand.u32 %s180, 1
        %s900 = smul.addr %s899, 8
        %s901 = scalar_lea.vmem [#allocation11], %s900
        // Predicated region
        $region61: #{tpu_custom_call.1} parent=35 // pred_check
          %p902 = pneg %p190
        $region62: #{tpu_custom_call.1} parent=35 // pred_check_branch
          %904 = sbr.rel (%p902) target = $region64
        $region63: #{tpu_custom_call.1} parent=35 // pred_region
          %906 = vsyncadd %s898, 0
          %s907 = sadd.s32 %s31, %s32
          %s908 = sadd.s32 %s907, %s30
          %s909 = smul.addr %s908, 8
          %s910 = scalar_lea.hbm %s4, %s909
          %s912 = sshll.u32 %s901, 4
          %s913 = int_to_ptr.vmem [resolvable:$true] %s912
          %s914 = sshll.u32 %s910, 4
          %s915 = int_to_ptr.hbm [resolvable:$true] %s914
          %917 = dma.vmem_to_hbm [thread:$0]  %s913, 128, %s915, %s898
        $region64: #{tpu_custom_call.1} parent=35 // pred_fallthru
          _
      $region36: #{tpu_custom_call.1} parent=5 // pred_fallthru
        _
      %p918 = scmp.le.s32.totalorder 2, %s19
      // Predicated region
      $region65: #{tpu_custom_call.1} parent=5 // pred_check
        %p919 = pneg %p918
      $region66: #{tpu_custom_call.1} parent=5 // pred_check_branch
        %921 = sbr.rel (%p919) target = $region68
      $region67: #{tpu_custom_call.1} parent=5 // pred_region
        %s922 = ssub.s32 %s19, 2
        // Predicated region
        $region69: #{tpu_custom_call.1} parent=67 // pred_check
          %p923 = pneg %p196
        $region70: #{tpu_custom_call.1} parent=67 // pred_check_branch
          %925 = sbr.rel (%p923) target = $region72
        $region71: #{tpu_custom_call.1} parent=67 // pred_region
          %s926 = sand.u32 %s181, 1
          %s927 = scalar_lea.sflag [#allocation7], %s926
          %s928 = sand.u32 %s181, 1
          %s929 = smul.addr %s928, 8
          %s930 = scalar_lea.vmem [#allocation11], %s929
          %932 = dma.done %s927, 128
        $region72: #{tpu_custom_call.1} parent=67 // pred_fallthru
          _
      $region68: #{tpu_custom_call.1} parent=5 // pred_fallthru
        _
    $region6: #{tpu_custom_call.1} parent=1 // loop_footer
      %s23 = sadd.s32 1, %s19
    $region7: #{tpu_custom_call.1} parent=1 // loop_footer_branch
      %18 = sbr.rel target = $region3
    $region8: #{tpu_custom_call.1} parent=1 // loop_exit
      _
    %933 = vsyncpa [#allocation6], 1
    %s934 = scalar_lea.sflag [#allocation6], 1
    %935 = vsyncpa %s934, 1
    %936 = vsyncpa [#allocation9], 1
    %s937 = scalar_lea.sflag [#allocation9], 1
    %938 = vsyncpa %s937, 1
    %939 = vsyncpa [#allocation7], 1
    %s940 = scalar_lea.sflag [#allocation7], 1
    %941 = vsyncpa %s940, 1

</llo_original>
